<compile_context>
chip_gen: v6e
topology: v6e:2x2x1
jax: 0.10.0
libtpu: 0.0.40
codegen_flags: <defaults>
</compile_context>

<pallas_src>
import jax
import jax.numpy as jnp
from jax.experimental import pallas as pl
from jax.experimental.pallas import tpu as pltpu


def _swish_kernel(beta_ref, x_ref, o_ref):
    # beta_ref: (1,) f32 in SMEM; x_ref/o_ref: (block_rows, LANE) tiles in VMEM.
    beta = beta_ref[0]
    x = x_ref[...].astype(jnp.float32)
    z = beta * x
    # sigmoid(z) = 0.5 * (1 + tanh(0.5 * z)): single transcendental per element.
    s = 0.5 * (1.0 + jnp.tanh(0.5 * z))
    o_ref[...] = (x * s).astype(o_ref.dtype)


_LANE_CHOICES = (1024, 512, 256, 128)
# ~2 MiB per block: with default double-buffering the VMEM footprint is
# ~4x block (in + out), i.e. ~8 MiB -- inside scoped-VMEM defaults on
# v5e (16 MiB), v6e (32 MiB) and v7x (32 MiB of 64 MiB physical).
_TARGET_BLOCK_BYTES = 2 * 1024 * 1024


def swish(x: jax.Array, beta) -> jax.Array:
    """Elementwise Swish with a learnable scalar beta, computed in a Pallas kernel."""
    orig_shape = x.shape
    dtype = x.dtype
    total = x.size

    # Pick the largest lane-dense trailing dim that divides the flat size
    # (no pad / extra HBM pass needed in the common case).
    lane = None
    for cand in _LANE_CHOICES:
        if total % cand == 0:
            lane = cand
            break

    flat = x.reshape(-1)
    if lane is None:
        # Rare fallback: pad only the sub-row tail (< 128 elements).
        lane = 128
        pad = (-total) % lane
        flat = jnp.pad(flat, (0, pad))
    rows = flat.size // lane
    x2d = flat.reshape(rows, lane)

    itemsize = jnp.dtype(dtype).itemsize
    # Block rows: target ~2 MiB blocks, multiple of 8 (sublane tiling), >= 8.
    block_rows = max(_TARGET_BLOCK_BYTES // (lane * itemsize), 8)
    block_rows = (block_rows // 8) * 8
    if rows <= block_rows:
        # Single block equal to the full array dims (always a legal block shape).
        block_rows = rows
        grid = (1,)
    else:
        # Boundary block (if rows % block_rows != 0) is masked by Pallas:
        # elementwise math on the padded garbage is safe, writes are clipped.
        grid = (pl.cdiv(rows, block_rows),)

    # Keep beta in f32 SMEM regardless of the input dtype (no double rounding).
    beta_arr = jnp.asarray(beta, dtype=jnp.float32).reshape(1)

    out2d = pl.pallas_call(
        _swish_kernel,
        out_shape=jax.ShapeDtypeStruct((rows, lane), dtype),
        grid=grid,
        in_specs=[
            pl.BlockSpec(memory_space=pltpu.SMEM),                # beta scalar
            pl.BlockSpec((block_rows, lane), lambda i: (i, 0)),   # x tile
        ],
        out_specs=pl.BlockSpec((block_rows, lane), lambda i: (i, 0)),
        compiler_params=pltpu.CompilerParams(
            dimension_semantics=("parallel",),
        ),
    )(beta_arr, x2d)

    out_flat = out2d.reshape(-1)
    if out_flat.size != total:
        out_flat = out_flat[:total]
    return out_flat.reshape(orig_shape)


if __name__ == "__main__":
    key = jax.random.PRNGKey(0)
    # Deterministic "parameter" init matching nn.Parameter(torch.tensor(beta)).
    beta = jnp.float32(1.0)

    # Small NCHW input consistent with typical conv-activation usage.
    x = jax.random.normal(key, (2, 4, 16, 16), dtype=jnp.float32)

    y = swish(x, beta)
    jax.block_until_ready(y)

    # Reference check (plain JAX).
    y_ref = x * jax.nn.sigmoid(beta * x)
    assert y.shape == x.shape and y.dtype == x.dtype
    assert jnp.max(jnp.abs(y - y_ref)) < 1e-5

    print("KERNEL_OK")
</pallas_src>

<mosaic_0001>
module attributes {stable_mosaic.version = 11 : i64} {
  func.func @_swish_kernel(%arg0: i32, %arg1: memref<1xf32, #tpu.memory_space<smem>>, %arg2: memref<2x1024xf32, #tpu.memory_space<vmem>>, %arg3: memref<2x1024xf32, #tpu.memory_space<vmem>>) attributes {dimension_semantics = [#tpu.dimension_semantics<parallel>], iteration_bounds = array<i64: 1>, scalar_prefetch = 0 : i64, scratch_operands = 0 : i64, tpu.core_type = #tpu.core_type<tc>, window_params = [{transform_indices = @transform_0, window_bounds = array<i64: 1>}, {transform_indices = @transform_1, window_bounds = array<i64: 2, 1024>}, {transform_indices = @transform_2, window_bounds = array<i64: 2, 1024>}]} {
    %c0 = arith.constant 0 : index
    %0 = memref.load %arg1[%c0] : memref<1xf32, #tpu.memory_space<smem>>
    %c0_0 = arith.constant 0 : index
    %c0_1 = arith.constant 0 : index
    %1 = vector.load %arg2[%c0_0, %c0_1] : memref<2x1024xf32, #tpu.memory_space<vmem>>, vector<2x1024xf32>
    %2 = vector.broadcast %0 : f32 to vector<2x1024xf32>
    %3 = arith.mulf %2, %1 : vector<2x1024xf32>
    %cst = arith.constant 5.000000e-01 : f32
    %4 = vector.broadcast %cst : f32 to vector<2x1024xf32>
    %5 = arith.mulf %4, %3 : vector<2x1024xf32>
    %6 = math.tanh %5 : vector<2x1024xf32>
    %cst_2 = arith.constant 1.000000e+00 : f32
    %7 = vector.broadcast %cst_2 : f32 to vector<2x1024xf32>
    %8 = arith.addf %7, %6 : vector<2x1024xf32>
    %cst_3 = arith.constant 5.000000e-01 : f32
    %9 = vector.broadcast %cst_3 : f32 to vector<2x1024xf32>
    %10 = arith.mulf %9, %8 : vector<2x1024xf32>
    %11 = arith.mulf %1, %10 : vector<2x1024xf32>
    %c0_4 = arith.constant 0 : index
    %c0_5 = arith.constant 0 : index
    %12 = vector.load %arg3[%c0_4, %c0_5] : memref<2x1024xf32, #tpu.memory_space<vmem>>, vector<2x1024xf32>
    tpu.vector_store %arg3[%c0_4, %c0_5], %11 {strides = array<i32>} : memref<2x1024xf32, #tpu.memory_space<vmem>>, vector<2x1024xf32>,
    return
  }
  func.func @transform_0(%arg0: i32) -> i32 {
    %c0_i32 = arith.constant 0 : i32
    %c0_i32_0 = arith.constant 0 : i32
    return %c0_i32 : i32
  }
  func.func @transform_1(%arg0: i32) -> (i32, i32) {
    %c0_i32 = arith.constant 0 : i32
    %c0_i32_0 = arith.constant 0 : i32
    return %arg0, %c0_i32 : i32, i32
  }
  func.func @transform_2(%arg0: i32) -> (i32, i32) {
    %c0_i32 = arith.constant 0 : i32
    %c0_i32_0 = arith.constant 0 : i32
    return %arg0, %c0_i32 : i32, i32
  }
}

</mosaic_0001>

<llo_original>
// kernel: tpu_custom_call.1
$region0: #{tpu_custom_call.1}
  #allocation0 [shape = 'u32[]', space=smem, size = 0x4, offset = 0x4, fixed_abs, tag = 'smem constant byte address 0x4 - core index']
  #allocation1 [shape = 'u32[144,128]{1,0:T(1,128)}', space=vmem, size = 0x12000, scoped, tag = 'internal scratch']
  #allocation2 [shape = 'f32[1]{0:T(128)S(6)}', space=smem, size = 0x200, scoped, tag = 'scoped memory for tpu_custom_call.1']
  %s0 = inlined_call_operand.<no memory space> [shape: f32[1], index: 0, kind: input, shape index: {}]
  %s1 = inlined_call_operand.hbm [shape: f32[2,1024], index: 1, kind: input, shape index: {}]
  %s2 = inlined_call_operand.hbm [shape: f32[2,1024], index: 2, kind: output, shape index: {}]
  %s3 = sld [smem:[#allocation0]]
  $region22: #{tpu_custom_call.1} parent=0
    _
  %s5 = ssub.s32 1, %s3
  %s6 = scalar_select 0, %s5, %s3
  %7 = sst [smem:[#allocation2]] %s0
  $region1: #{tpu_custom_call.1} parent=0
    #allocation3 [shape = 'u8[8192]{0}', space=vmem, size = 0x2000, scoped, tag = 'input window, operand 1, single buffered']
    #allocation4 [shape = 's32[1]{0}', space=sflag, size = 0x4, scoped, tag = 'scoped memory for tpu_custom_call.1']
    #allocation5 [shape = 's32[1]{0}', space=sflag, size = 0x4, scoped, tag = 'scoped memory for tpu_custom_call.1']
    #allocation6 [shape = 'u8[8192]{0}', space=vmem, size = 0x2000, scoped, tag = 'output window, operand 0, single buffered']
    %8 = vsyncpa [#allocation4], 0
    %9 = vsyncpa [#allocation5], 0
    // Predicated region
    $region2: #{tpu_custom_call.1} parent=1 // pred_check
      _
    $region3: #{tpu_custom_call.1} parent=1 // pred_check_branch
      %11 = sbr.rel (0) target = $region5
    $region4: #{tpu_custom_call.1} parent=1 // pred_region
      _
    $region5: #{tpu_custom_call.1} parent=1 // pred_fallthru
      _
    // Predicated region
    $region6: #{tpu_custom_call.1} parent=1 // pred_check
      _
    $region7: #{tpu_custom_call.1} parent=1 // pred_check_branch
      %13 = sbr.rel (0) target = $region9
    $region8: #{tpu_custom_call.1} parent=1 // pred_region
      %s15 = ssub.s32 256, 256
      %16 = vsyncadd [#allocation4], %s15
      %s18 = sshll.u32 [#allocation3], 4
      %s19 = int_to_ptr.vmem [resolvable:$true] %s18
      %21 = dma.hbm_to_vmem [thread:$0]  %s1, 256, %s19, [#allocation4]
    $region9: #{tpu_custom_call.1} parent=1 // pred_fallthru
      _
    // Predicated region
    $region10: #{tpu_custom_call.1} parent=1 // pred_check
      _
    $region11: #{tpu_custom_call.1} parent=1 // pred_check_branch
      %23 = sbr.rel (0) target = $region13
    $region12: #{tpu_custom_call.1} parent=1 // pred_region
      %24 = dma.done [#allocation4], 256
    $region13: #{tpu_custom_call.1} parent=1 // pred_fallthru
      _
    %s25 = sld [smem:[#allocation2]]
    %v26 = vld [vmem:[#allocation3] sm:$0xff]
    %v27 = vld [vmem:[#allocation3 + $0x8] sm:$0xff]
    %v28 = vstv %s25
    %v29 = vmul.f32 %v28, %v26
    %v30 = vmul.f32 %v28, %v27
    %v31 = vmul.f32 %v29, 0.5
    %v32 = vmul.f32 %v30, 0.5
    %v33 = vtanh.pop %v31
    %v34 = vtanh.pop %v32
    %v35 = vadd.f32 %v33, 1.0
    %v36 = vadd.f32 %v34, 1.0
    %v37 = vmul.f32 %v35, 0.5
    %v38 = vmul.f32 %v36, 0.5
    %v39 = vmul.f32 %v26, %v37
    %v40 = vmul.f32 %v27, %v38
    %41 = vst [vmem:[#allocation6] sm:$0xff] %v39
    %42 = vst [vmem:[#allocation6 + $0x8] sm:$0xff] %v40
    // Predicated region
    $region14: #{tpu_custom_call.1} parent=1 // pred_check
      _
    $region15: #{tpu_custom_call.1} parent=1 // pred_check_branch
      %44 = sbr.rel (0) target = $region17
    $region16: #{tpu_custom_call.1} parent=1 // pred_region
      %s46 = ssub.s32 256, 256
      %47 = vsyncadd [#allocation5], %s46
      %s49 = sshll.u32 [#allocation6], 4
      %s50 = int_to_ptr.vmem [resolvable:$true] %s49
      %52 = dma.vmem_to_hbm [thread:$0]  %s50, 256, %s2, [#allocation5]
    $region17: #{tpu_custom_call.1} parent=1 // pred_fallthru
      _
    // Predicated region
    $region18: #{tpu_custom_call.1} parent=1 // pred_check
      _
    $region19: #{tpu_custom_call.1} parent=1 // pred_check_branch
      %54 = sbr.rel (0) target = $region21
    $region20: #{tpu_custom_call.1} parent=1 // pred_region
      %55 = dma.done [#allocation5], 256
    $region21: #{tpu_custom_call.1} parent=1 // pred_fallthru
      _
    %56 = vsyncpa [#allocation4], 1
    %57 = vsyncpa [#allocation5], 1

</llo_original>
